<compile_context>
chip_gen: v6e
topology: v6e:2x2x1
jax: 0.10.0
libtpu: 0.0.40
codegen_flags: <defaults>
</compile_context>

<pallas_src>
import jax
import jax.numpy as jnp
from jax.experimental import pallas as pl
from jax.experimental.pallas import tpu as pltpu


def _sine_kernel(w0_ref, x_ref, o_ref):
    # w0 lives in SMEM as a runtime scalar; broadcast multiply is hoisted
    # once per tile.  Compute in f32, cast back at the store.
    w0 = w0_ref[0]
    x = x_ref[...].astype(jnp.float32)
    o_ref[...] = jnp.sin(w0 * x).astype(o_ref.dtype)


def _round_up(a, b):
    return ((a + b - 1) // b) * b


def sine(x, w0=1.0, *, max_block_rows=1024, min_grid_steps=8):
    """Elementwise sin(w0 * x) for an arbitrarily shaped array via Pallas."""
    orig_shape = x.shape
    dtype = x.dtype
    n = x.size
    if n == 0:
        return x

    # ---- lane-dense column width; prefer one that avoids any pad/slice ----
    needs_pad = True
    cols = 128
    for cand in (512, 256, 128):
        if n % cand == 0:
            cols, needs_pad = cand, False
            break

    rows = pl.cdiv(n, cols)

    # ---- sublane-aligned block rows, sized for enough grid steps ----------
    itemsize = jnp.dtype(dtype).itemsize
    sub = {4: 8, 2: 16, 1: 32}.get(itemsize, 8)
    if rows <= sub:
        block_rows = rows                                  # full-dim block (legal)
    else:
        target = max(sub, pl.cdiv(rows, min_grid_steps))   # >= min_grid_steps steps
        block_rows = min(max_block_rows, _round_up(target, sub))
    num_blocks = pl.cdiv(rows, block_rows)                 # partial last block is masked

    # ---- 2-D lane-dense view ----------------------------------------------
    if needs_pad:
        pad = rows * cols - n                              # only up to a cols multiple
        x2 = jnp.pad(x.reshape(-1), (0, pad)).reshape(rows, cols)
    else:
        x2 = x.reshape(rows, cols)                         # free contiguous reshape

    w0_arr = jnp.asarray(w0, jnp.float32).reshape(1)

    out = pl.pallas_call(
        _sine_kernel,
        out_shape=jax.ShapeDtypeStruct((rows, cols), dtype),
        grid=(num_blocks,),
        in_specs=[
            pl.BlockSpec(memory_space=pltpu.MemorySpace.SMEM),      # w0 scalar
            pl.BlockSpec((block_rows, cols), lambda i: (i, 0)),
        ],
        out_specs=pl.BlockSpec((block_rows, cols), lambda i: (i, 0)),
        compiler_params=pltpu.CompilerParams(
            dimension_semantics=("parallel",),             # shard grid across TCs (v7x)
        ),
    )(w0_arr, x2)

    if needs_pad:
        return out.reshape(-1)[:n].reshape(orig_shape)
    return out.reshape(orig_shape)


if __name__ == "__main__":
    key = jax.random.PRNGKey(0)

    # Fast path (no pad): 2*4*16*16 = 2048 elements, divisible by 512.
    x = jax.random.normal(key, (2, 4, 16, 16), jnp.float32)
    w0 = jnp.float32(30.0)                                 # typical SIREN w0 (traced, no recompile)

    fwd = jax.jit(sine)
    out = jax.block_until_ready(fwd(x, w0))
    ref = jnp.sin(30.0 * x)
    assert out.shape == x.shape and out.dtype == x.dtype
    assert bool(jnp.all(jnp.isfinite(out)))
    assert bool(jnp.allclose(out, ref, atol=1e-5, rtol=1e-5))

    # Padded path: 3*5*7 = 105 elements (not a multiple of 128), default w0=1.0.
    x2 = jax.random.normal(jax.random.PRNGKey(1), (3, 5, 7), jnp.float32)
    out2 = jax.block_until_ready(fwd(x2, jnp.float32(1.0)))
    ref2 = jnp.sin(x2)
    assert out2.shape == x2.shape
    assert bool(jnp.allclose(out2, ref2, atol=1e-5, rtol=1e-5))

    print("KERNEL_OK")
</pallas_src>

<mosaic_0001>
module attributes {stable_mosaic.version = 11 : i64} {
  func.func @_sine_kernel(%arg0: i32, %arg1: memref<1xf32, #tpu.memory_space<smem>>, %arg2: memref<4x512xf32, #tpu.memory_space<vmem>>, %arg3: memref<4x512xf32, #tpu.memory_space<vmem>>) attributes {dimension_semantics = [#tpu.dimension_semantics<parallel>], iteration_bounds = array<i64: 1>, scalar_prefetch = 0 : i64, scratch_operands = 0 : i64, tpu.core_type = #tpu.core_type<tc>, window_params = [{transform_indices = @transform_0, window_bounds = array<i64: 1>}, {transform_indices = @transform_1, window_bounds = array<i64: 4, 512>}, {transform_indices = @transform_2, window_bounds = array<i64: 4, 512>}]} {
    %c0 = arith.constant 0 : index
    %0 = memref.load %arg1[%c0] : memref<1xf32, #tpu.memory_space<smem>>
    %c0_0 = arith.constant 0 : index
    %c0_1 = arith.constant 0 : index
    %1 = vector.load %arg2[%c0_0, %c0_1] : memref<4x512xf32, #tpu.memory_space<vmem>>, vector<4x512xf32>
    %2 = vector.broadcast %0 : f32 to vector<4x512xf32>
    %3 = arith.mulf %2, %1 : vector<4x512xf32>
    %4 = math.sin %3 : vector<4x512xf32>
    %c0_2 = arith.constant 0 : index
    %c0_3 = arith.constant 0 : index
    %5 = vector.load %arg3[%c0_2, %c0_3] : memref<4x512xf32, #tpu.memory_space<vmem>>, vector<4x512xf32>
    tpu.vector_store %arg3[%c0_2, %c0_3], %4 {strides = array<i32>} : memref<4x512xf32, #tpu.memory_space<vmem>>, vector<4x512xf32>,
    return
  }
  func.func @transform_0(%arg0: i32) -> i32 {
    %c0_i32 = arith.constant 0 : i32
    %c0_i32_0 = arith.constant 0 : i32
    return %c0_i32 : i32
  }
  func.func @transform_1(%arg0: i32) -> (i32, i32) {
    %c0_i32 = arith.constant 0 : i32
    %c0_i32_0 = arith.constant 0 : i32
    return %arg0, %c0_i32 : i32, i32
  }
  func.func @transform_2(%arg0: i32) -> (i32, i32) {
    %c0_i32 = arith.constant 0 : i32
    %c0_i32_0 = arith.constant 0 : i32
    return %arg0, %c0_i32 : i32, i32
  }
}

</mosaic_0001>

<llo_original>
// kernel: sine.1
$region0: #{sine.1}
  #allocation0 [shape = 'u32[]', space=smem, size = 0x4, offset = 0x4, fixed_abs, tag = 'smem constant byte address 0x4 - core index']
  #allocation1 [shape = 'u32[144,128]{1,0:T(1,128)}', space=vmem, size = 0x12000, scoped, tag = 'internal scratch']
  #allocation2 [shape = 'f32[1]{0:T(128)S(6)}', space=smem, size = 0x200, scoped, tag = 'scoped memory for sine.1']
  %s0 = inlined_call_operand.<no memory space> [shape: f32[1], index: 0, kind: input, shape index: {}]
  %s1 = inlined_call_operand.vmem [shape: f32[4,512], index: 1, kind: input, shape index: {}]
  %s2 = inlined_call_operand.vmem [shape: f32[4,512], index: 2, kind: output, shape index: {}]
  %s3 = sld [smem:[#allocation0]]
  $region18: #{sine.1} parent=0
    _
  %s5 = ssub.s32 1, %s3
  %s6 = scalar_select 0, %s5, %s3
  %7 = sst [smem:[#allocation2]] %s0
  // Predicated region
  $region2: #{sine.1} parent=0 // pred_check
    _
  $region3: #{sine.1} parent=0 // pred_check_branch
    %9 = sbr.rel (0) target = $region5
  $region4: #{sine.1} parent=0 // pred_region
    _
  $region5: #{sine.1} parent=0 // pred_fallthru
    _
  // Predicated region
  $region6: #{sine.1} parent=0 // pred_check
    _
  $region7: #{sine.1} parent=0 // pred_check_branch
    %11 = sbr.rel (0) target = $region9
  $region8: #{sine.1} parent=0 // pred_region
    _
  $region9: #{sine.1} parent=0 // pred_fallthru
    _
  %s12 = sld [smem:[#allocation2]]
  %v13 = vld [vmem:[%s1] sm:$0xff]
  %v14 = vld [vmem:[%s1 + $0x8] sm:$0xff]
  %v15 = vstv %s12
  %v16 = vmul.f32 %v15, %v13
  %v17 = vmul.f32 %v15, %v14
  %v18 = vand.u32 2147483647, %v16
  %vm19 = vcmp.le.f32.partialorder %v18, 0.7853982
  %vm20 = vcmp.lt.s32.totalorder %v16, 0
  %v21 = vand.u32 %v16, 2139095040
  %v22 = vshrl.u32 %v21, 23
  %v23 = vsub.s32 %v22, 127
  %v24 = vand.u32 2147483647, %v16
  %v25 = vand.u32 %v24, 8388607
  %v26 = vor.u32 %v25, 8388608
  %v27 = vsub.s32 0, %v26
  %v28 = vadd.s32 %v23, 1
  %vm29 = vcmp.gt.s32.totalorder %v28, 0
  %v30 = vsel %vm29, %v28, 0
  %v31 = vshrl.u32 %v30, 5
  %v32 = vand.u32 %v30, 31
  %v33 = vsub.s32 32, %v32
  %v34 = vshrl.u32 683565275, %v33
  %v35 = vshll.u32 683565275, %v32
  %v36 = vshrl.u32 2475754826, %v33
  %v37 = vor.u32 %v35, %v36
  %v38 = vshll.u32 2475754826, %v32
  %v39 = vshrl.u32 2131351028, %v33
  %v40 = vor.u32 %v38, %v39
  %v41 = vshll.u32 2131351028, %v32
  %v42 = vshrl.u32 2102212464, %v33
  %v43 = vor.u32 %v41, %v42
  %v44 = vshll.u32 2102212464, %v32
  %v45 = vshrl.u32 920167782, %v33
  %v46 = vor.u32 %v44, %v45
  %v47 = vshll.u32 920167782, %v32
  %v48 = vshrl.u32 1326507024, %v33
  %v49 = vor.u32 %v47, %v48
  %vm50 = vcmp.lt.s32.totalorder %v31, 1
  %vm51 = vcmp.lt.s32.totalorder %v31, 2
  %vm52 = vcmp.lt.s32.totalorder %v31, 3
  %vm53 = vcmp.lt.s32.totalorder %v31, 4
  %v54 = vsel %vm50, %v34, %v37
  %v55 = vsel %vm53, %v43, 2102212464
  %v56 = vsel %vm52, %v40, %v55
  %v57 = vsel %vm51, %v54, %v56
  %v58 = vsel %vm50, %v37, %v40
  %v59 = vsel %vm53, %v46, 920167782
  %v60 = vsel %vm52, %v43, %v59
  %v61 = vsel %vm51, %v58, %v60
  %v62 = vsel %vm50, %v40, %v43
  %v63 = vsel %vm53, %v49, 1326507024
  %v64 = vsel %vm52, %v46, %v63
  %v65 = vsel %vm51, %v62, %v64
  %v66 = vshll.u32 %v26, 8
  %v67 = vmul.u32.u64.compose %v66, %v65
  %v68 = vextract.low.u32 %v67
  %v69 = vextract.high.u32 %v67
  %v70 = vmul.u32.u64.compose %v66, %v61
  %v71 = vextract.low.u32 %v70
  %v72 = vextract.high.u32 %v70
  %v73 = vmul.u32 %v66, %v57
  %v74 = vadd.s32 %v69, %v71
  %vm75 = vc.u32 %v69, %v71
  %v76 = vadd.s32 %v72, 1
  %v77 = vsel %vm75, %v76, %v72
  %v78 = vadd.s32 %v73, %v77
  %v79 = vadd.s32 %v78, 536870912
  %v80 = vshrl.u32 %v79, 30
  %v81 = vshll.u32 %v80, 30
  %v82 = vsub.s32 %v78, %v81
  %vm83 = vcmp.lt.s32.totalorder %v82, 0
  %v84 = vsub.s32 0, %v82
  %v85 = vsel %vm83, %v84, %v82
  %v86 = vclz %v85
  %v87 = vsub.s32 %v86, 2
  %vm88 = vcmp.gt.s32.totalorder 0, %v87
  %v89 = vsel %vm88, 0, %v87
  %v90 = vsub.s32 32, %v89
  %v91 = vshll.u32 %v82, %v89
  %v92 = vshrl.u32 %v74, %v90
  %v93 = vor.u32 %v91, %v92
  %v94 = vsub.s32 4294967266, %v89
  %v95 = vadd.s32 %v94, 127
  %v96 = vshll.u32 %v95, 23
  %v97 = vor.u32 4788187, %v96
  %v98 = vand.u32 2147483647, %v97
  %v100 = vcvt.s32.f32 %v93
  %v101 = vmul.f32 %v100, %v98
  %v102 = vxor.u32 %v101, 2147483648
  %v103 = vsel %vm20, %v102, %v101
  %v104 = vsub.s32 4, %v80
  %v105 = vsel %vm20, %v104, %v80
  %v106 = vsel %vm19, %v16, %v103
  %v107 = vsel %vm19, 0, %v105
  %v108 = vcosq.f32.pop %v106
  %v109 = vsinq.f32.pop %v106
  %vm110 = vweird.f32 %v16
  %v111 = vadd.s32 %v107, 3
  %v112 = vand.u32 %v111, 3
  %vm113 = vcmp.lt.s32.totalorder %v112, 2
  %vm114 = vcmp.eq.s32.totalorder %v112, 0
  %v115 = vxor.u32 %v109, 2147483648
  %v116 = vsel %vm114, %v108, %v115
  %vm117 = vcmp.eq.s32.totalorder %v112, 2
  %v118 = vxor.u32 %v108, 2147483648
  %v119 = vsel %vm117, %v118, %v109
  %v120 = vsel %vm113, %v116, %v119
  %v121 = vsel %vm110, nan, %v120
  %v122 = vand.u32 2147483647, %v17
  %vm123 = vcmp.le.f32.partialorder %v122, 0.7853982
  %vm124 = vcmp.lt.s32.totalorder %v17, 0
  %v125 = vand.u32 %v17, 2139095040
  %v126 = vshrl.u32 %v125, 23
  %v127 = vsub.s32 %v126, 127
  %v128 = vand.u32 2147483647, %v17
  %v129 = vand.u32 %v128, 8388607
  %v130 = vor.u32 %v129, 8388608
  %v131 = vsub.s32 0, %v130
  %v132 = vadd.s32 %v127, 1
  %vm133 = vcmp.gt.s32.totalorder %v132, 0
  %v134 = vsel %vm133, %v132, 0
  %v135 = vshrl.u32 %v134, 5
  %v136 = vand.u32 %v134, 31
  %v137 = vsub.s32 32, %v136
  %v138 = vshrl.u32 683565275, %v137
  %v139 = vshll.u32 683565275, %v136
  %v140 = vshrl.u32 2475754826, %v137
  %v141 = vor.u32 %v139, %v140
  %v142 = vshll.u32 2475754826, %v136
  %v143 = vshrl.u32 2131351028, %v137
  %v144 = vor.u32 %v142, %v143
  %v145 = vshll.u32 2131351028, %v136
  %v146 = vshrl.u32 2102212464, %v137
  %v147 = vor.u32 %v145, %v146
  %v148 = vshll.u32 2102212464, %v136
  %v149 = vshrl.u32 920167782, %v137
  %v150 = vor.u32 %v148, %v149
  %v151 = vshll.u32 920167782, %v136
  %v152 = vshrl.u32 1326507024, %v137
  %v153 = vor.u32 %v151, %v152
  %vm154 = vcmp.lt.s32.totalorder %v135, 1
  %vm155 = vcmp.lt.s32.totalorder %v135, 2
  %vm156 = vcmp.lt.s32.totalorder %v135, 3
  %vm157 = vcmp.lt.s32.totalorder %v135, 4
  %v158 = vsel %vm154, %v138, %v141
  %v159 = vsel %vm157, %v147, 2102212464
  %v160 = vsel %vm156, %v144, %v159
  %v161 = vsel %vm155, %v158, %v160
  %v162 = vsel %vm154, %v141, %v144
  %v163 = vsel %vm157, %v150, 920167782
  %v164 = vsel %vm156, %v147, %v163
  %v165 = vsel %vm155, %v162, %v164
  %v166 = vsel %vm154, %v144, %v147
  %v167 = vsel %vm157, %v153, 1326507024
  %v168 = vsel %vm156, %v150, %v167
  %v169 = vsel %vm155, %v166, %v168
  %v170 = vshll.u32 %v130, 8
  %v171 = vmul.u32.u64.compose %v170, %v169
  %v172 = vextract.low.u32 %v171
  %v173 = vextract.high.u32 %v171
  %v174 = vmul.u32.u64.compose %v170, %v165
  %v175 = vextract.low.u32 %v174
  %v176 = vextract.high.u32 %v174
  %v177 = vmul.u32 %v170, %v161
  %v178 = vadd.s32 %v173, %v175
  %vm179 = vc.u32 %v173, %v175
  %v180 = vadd.s32 %v176, 1
  %v181 = vsel %vm179, %v180, %v176
  %v182 = vadd.s32 %v177, %v181
  %v183 = vadd.s32 %v182, 536870912
  %v184 = vshrl.u32 %v183, 30
  %v185 = vshll.u32 %v184, 30
  %v186 = vsub.s32 %v182, %v185
  %vm187 = vcmp.lt.s32.totalorder %v186, 0
  %v188 = vsub.s32 0, %v186
  %v189 = vsel %vm187, %v188, %v186
  %v190 = vclz %v189
  %v191 = vsub.s32 %v190, 2
  %vm192 = vcmp.gt.s32.totalorder 0, %v191
  %v193 = vsel %vm192, 0, %v191
  %v194 = vsub.s32 32, %v193
  %v195 = vshll.u32 %v186, %v193
  %v196 = vshrl.u32 %v178, %v194
  %v197 = vor.u32 %v195, %v196
  %v198 = vsub.s32 4294967266, %v193
  %v199 = vadd.s32 %v198, 127
  %v200 = vshll.u32 %v199, 23
  %v201 = vor.u32 4788187, %v200
  %v202 = vand.u32 2147483647, %v201
  %v204 = vcvt.s32.f32 %v197
  %v205 = vmul.f32 %v204, %v202
  %v206 = vxor.u32 %v205, 2147483648
  %v207 = vsel %vm124, %v206, %v205
  %v208 = vsub.s32 4, %v184
  %v209 = vsel %vm124, %v208, %v184
  %v210 = vsel %vm123, %v17, %v207
  %v211 = vsel %vm123, 0, %v209
  %v212 = vcosq.f32.pop %v210
  %v213 = vsinq.f32.pop %v210
  %vm214 = vweird.f32 %v17
  %v215 = vadd.s32 %v211, 3
  %v216 = vand.u32 %v215, 3
  %vm217 = vcmp.lt.s32.totalorder %v216, 2
  %vm218 = vcmp.eq.s32.totalorder %v216, 0
  %v219 = vxor.u32 %v213, 2147483648
  %v220 = vsel %vm218, %v212, %v219
  %vm221 = vcmp.eq.s32.totalorder %v216, 2
  %v222 = vxor.u32 %v212, 2147483648
  %v223 = vsel %vm221, %v222, %v213
  %v224 = vsel %vm217, %v220, %v223
  %v225 = vsel %vm214, nan, %v224
  %226 = vst [vmem:[%s2] sm:$0xff] %v121
  %227 = vst [vmem:[%s2 + $0x8] sm:$0xff] %v225
  // Predicated region
  $region10: #{sine.1} parent=0 // pred_check
    _
  $region11: #{sine.1} parent=0 // pred_check_branch
    %229 = sbr.rel (0) target = $region13
  $region12: #{sine.1} parent=0 // pred_region
    _
  $region13: #{sine.1} parent=0 // pred_fallthru
    _
  // Predicated region
  $region14: #{sine.1} parent=0 // pred_check
    _
  $region15: #{sine.1} parent=0 // pred_check_branch
    %231 = sbr.rel (0) target = $region17
  $region16: #{sine.1} parent=0 // pred_region
    _
  $region17: #{sine.1} parent=0 // pred_fallthru
    _

</llo_original>
